<compile_context>
chip_gen: v6e
topology: v6e:2x2x1
jax: 0.10.0
libtpu: 0.0.40
codegen_flags: <defaults>
</compile_context>

<pallas_src>
import functools

import jax
import jax.numpy as jnp
from jax import lax
from jax.experimental import pallas as pl
from jax.experimental.pallas import tpu as pltpu


def _round_up(x, m):
    return ((x + m - 1) // m) * m


def _dc_ce_kernel(logits_ref, tgt_ref,                       # inputs  (C,TN), (1,TN)
                  tp_ref, fp_ref, fn_ref, ce_ref,            # outputs (C,1)x3, (1,1)
                  tp_acc, ps_acc, ys_acc, ce_acc,            # VMEM scratch
                  *, hw, needs_mask):
    i = pl.program_id(1)                                     # pixel-tile index

    @pl.when(i == 0)
    def _():
        tp_acc[...] = jnp.zeros_like(tp_acc)
        ps_acc[...] = jnp.zeros_like(ps_acc)
        ys_acc[...] = jnp.zeros_like(ys_acc)
        ce_acc[...] = jnp.zeros_like(ce_acc)

    x = logits_ref[...].astype(jnp.float32)                  # (C, TN)
    t = tgt_ref[...]                                         # (1, TN) int32
    c_dim, tn = x.shape

    cls = lax.broadcasted_iota(jnp.int32, (c_dim, tn), 0)
    hit = cls == t                                           # one-hot predicate

    if needs_mask:
        lane = lax.broadcasted_iota(jnp.int32, (1, tn), 1)
        valid = (i * tn + lane) < hw                         # (1, TN) bool
        hit = jnp.logical_and(hit, valid)

    y = hit.astype(jnp.float32)                              # masked one-hot (C, TN)

    # softmax over the class (sublane) axis -- softmax_helper_dim1
    m = jnp.max(x, axis=0, keepdims=True)                    # (1, TN)
    s = x - m
    e = jnp.exp(s)
    sum_e = jnp.sum(e, axis=0, keepdims=True)                # (1, TN)
    p = e * pl.reciprocal(sum_e, approx=False)               # (C, TN)
    if needs_mask:
        p = jnp.where(valid, p, 0.0)                         # kills OOB-lane garbage/NaN

    # soft dice statistics: tp = sum(p*y); fp = sum(p) - tp; fn = sum(y) - tp
    py = p * y
    tp_acc[...] += py
    ps_acc[...] += p
    ys_acc[...] += y

    # cross entropy per pixel: logsumexp(x) - x[target] = log(sum_e) - s[target]
    s_t = jnp.sum(s * y, axis=0, keepdims=True)              # (1, TN)
    ce_pix = jnp.log(sum_e) - s_t
    if needs_mask:
        ce_pix = jnp.where(valid, ce_pix, 0.0)
    ce_acc[...] += ce_pix

    @pl.when(i == pl.num_programs(1) - 1)
    def _():
        tp_c = jnp.sum(tp_acc[...], axis=1, keepdims=True)   # (C, 1)
        ps_c = jnp.sum(ps_acc[...], axis=1, keepdims=True)
        ys_c = jnp.sum(ys_acc[...], axis=1, keepdims=True)
        tp_ref[...] = tp_c
        fp_ref[...] = ps_c - tp_c
        fn_ref[...] = ys_c - tp_c
        ce_ref[...] = jnp.sum(ce_acc[...], axis=1, keepdims=True)


def dc_and_ce_loss(net_output, target, *,
                   weight_ce=1.0, weight_dice=1.0,
                   batch_dice=True, do_bg=False, smooth=1e-5,
                   tile_n=1024):
    """net_output: (B, C, H, W) logits; target: (B, 1, H, W) integer labels.

    Equivalent of DC_and_CE_loss(soft_dice_kwargs={'batch_dice':..., 'smooth':1e-5,
    'do_bg':False}, ce_kwargs={}, weight_ce=1, weight_dice=1, ignore_label=None).
    """
    # TODO(synk): ignore_label / loss_mask handling is not implemented (default None).
    B, C, H, W = net_output.shape
    HW = H * W

    # Free reshapes only -- no transpose, no padding, no extra HBM passes.
    logits = net_output.reshape(B, C, HW)
    tgt = target.reshape(B, 1, HW).astype(jnp.int32)

    tn = _round_up(min(int(tile_n), _round_up(HW, 128)), 128)
    n_tiles = (HW + tn - 1) // tn
    needs_mask = (HW % tn) != 0

    kernel = functools.partial(_dc_ce_kernel, hw=HW, needs_mask=needs_mask)

    stat_shape = jax.ShapeDtypeStruct((B, C, 1), jnp.float32)
    stat_spec = pl.BlockSpec((None, C, 1), lambda b, i: (b, 0, 0))

    tp_o, fp_o, fn_o, ce_o = pl.pallas_call(
        kernel,
        out_shape=(stat_shape, stat_shape, stat_shape,
                   jax.ShapeDtypeStruct((B, 1, 1), jnp.float32)),
        grid_spec=pltpu.PrefetchScalarGridSpec(
            num_scalar_prefetch=0,
            grid=(B, n_tiles),
            in_specs=[
                pl.BlockSpec((None, C, tn), lambda b, i: (b, 0, i)),
                pl.BlockSpec((None, 1, tn), lambda b, i: (b, 0, i)),
            ],
            out_specs=(
                stat_spec, stat_spec, stat_spec,
                pl.BlockSpec((None, 1, 1), lambda b, i: (b, 0, 0)),
            ),
            scratch_shapes=[
                pltpu.VMEM((C, tn), jnp.float32),   # tp accumulator
                pltpu.VMEM((C, tn), jnp.float32),   # sum(p) accumulator
                pltpu.VMEM((C, tn), jnp.float32),   # sum(y) accumulator
                pltpu.VMEM((1, tn), jnp.float32),   # CE accumulator
            ]),
        compiler_params=pltpu.CompilerParams(
            dimension_semantics=("parallel", "arbitrary")),
    )(logits, tgt)

    tp = tp_o[:, :, 0]      # (B, C)
    fp = fp_o[:, :, 0]
    fn = fn_o[:, :, 0]

    # SoftDiceLoss tail
    if batch_dice:
        tp, fp, fn = tp.sum(0), fp.sum(0), fn.sum(0)         # (C,)
    nominator = 2.0 * tp + smooth
    denominator = jnp.maximum(2.0 * tp + fp + fn + smooth, 1e-8)
    dc = nominator / denominator
    if not do_bg:
        dc = dc[1:] if batch_dice else dc[:, 1:]
    dc_loss = -jnp.mean(dc)

    # CrossEntropyLoss tail: mean over all pixels
    ce_loss = jnp.sum(ce_o) / (B * HW)

    return weight_ce * ce_loss + weight_dice * dc_loss


def _reference(net_output, target, *,
               weight_ce=1.0, weight_dice=1.0,
               batch_dice=True, do_bg=False, smooth=1e-5):
    """Pure-JAX reference mirroring the PyTorch DC_and_CE_loss semantics."""
    B, C, H, W = net_output.shape
    x = net_output.astype(jnp.float32)
    p = jax.nn.softmax(x, axis=1)                            # (B, C, H, W)
    t = target[:, 0].astype(jnp.int32)                       # (B, H, W)
    y = jnp.transpose(jax.nn.one_hot(t, C, dtype=jnp.float32), (0, 3, 1, 2))

    axes = (0, 2, 3) if batch_dice else (2, 3)
    tp = jnp.sum(p * y, axis=axes)
    fp = jnp.sum(p * (1.0 - y), axis=axes)
    fn = jnp.sum((1.0 - p) * y, axis=axes)
    dc = (2.0 * tp + smooth) / jnp.maximum(2.0 * tp + fp + fn + smooth, 1e-8)
    if not do_bg:
        dc = dc[1:] if batch_dice else dc[:, 1:]
    dc_loss = -jnp.mean(dc)

    logp = jax.nn.log_softmax(x, axis=1)
    ce = -jnp.take_along_axis(logp, t[:, None], axis=1)[:, 0]
    ce_loss = jnp.mean(ce)

    return weight_ce * ce_loss + weight_dice * dc_loss


if __name__ == "__main__":
    key = jax.random.PRNGKey(0)

    # Test 1: aligned spatial size, batch_dice=True.
    k1, k2 = jax.random.split(key)
    B, C, H, W = 2, 4, 16, 16
    net_output = jax.random.normal(k1, (B, C, H, W), dtype=jnp.float32)
    target = jax.random.randint(k2, (B, 1, H, W), 0, C, dtype=jnp.int32)

    loss = jax.block_until_ready(jax.jit(dc_and_ce_loss)(net_output, target))
    ref = _reference(net_output, target)
    assert jnp.isfinite(loss), "loss is not finite"
    assert jnp.allclose(loss, ref, rtol=1e-4, atol=1e-5), (loss, ref)

    # Test 2: ragged pixel count (exercises in-kernel tail masking) and
    # per-sample dice (batch_dice=False).
    k3, k4 = jax.random.split(k1)
    B2, C2, H2, W2 = 2, 3, 10, 10
    net_output2 = jax.random.normal(k3, (B2, C2, H2, W2), dtype=jnp.float32)
    target2 = jax.random.randint(k4, (B2, 1, H2, W2), 0, C2, dtype=jnp.int32)

    f2 = jax.jit(functools.partial(dc_and_ce_loss, batch_dice=False))
    loss2 = jax.block_until_ready(f2(net_output2, target2))
    ref2 = _reference(net_output2, target2, batch_dice=False)
    assert jnp.isfinite(loss2), "loss2 is not finite"
    assert jnp.allclose(loss2, ref2, rtol=1e-4, atol=1e-5), (loss2, ref2)

    print("KERNEL_OK")
</pallas_src>

<mosaic_0001>
module attributes {stable_mosaic.version = 11 : i64} {
  func.func @_dc_ce_kernel(%arg0: i32, %arg1: i32, %arg2: memref<1x4x256xf32, #tpu.memory_space<vmem>>, %arg3: memref<1x1x256xi32, #tpu.memory_space<vmem>>, %arg4: memref<1x4x1xf32, #tpu.memory_space<vmem>>, %arg5: memref<1x4x1xf32, #tpu.memory_space<vmem>>, %arg6: memref<1x4x1xf32, #tpu.memory_space<vmem>>, %arg7: memref<1x1x1xf32, #tpu.memory_space<vmem>>, %arg8: memref<4x256xf32, #tpu.memory_space<vmem>>, %arg9: memref<4x256xf32, #tpu.memory_space<vmem>>, %arg10: memref<4x256xf32, #tpu.memory_space<vmem>>, %arg11: memref<1x256xf32, #tpu.memory_space<vmem>>) attributes {dimension_semantics = [#tpu.dimension_semantics<parallel>, #tpu.dimension_semantics<arbitrary>], iteration_bounds = array<i64: 2, 1>, scalar_prefetch = 0 : i64, scratch_operands = 4 : i64, tpu.core_type = #tpu.core_type<tc>, window_params = [{transform_indices = @transform_0, window_bounds = array<i64: 1, 4, 256>}, {transform_indices = @transform_1, window_bounds = array<i64: 1, 1, 256>}, {transform_indices = @transform_2, window_bounds = array<i64: 1, 4, 1>}, {transform_indices = @transform_3, window_bounds = array<i64: 1, 4, 1>}, {transform_indices = @transform_4, window_bounds = array<i64: 1, 4, 1>}, {transform_indices = @transform_5, window_bounds = array<i64: 1, 1, 1>}]} {
    %c0_i32 = arith.constant 0 : i32
    %0 = arith.cmpi eq, %arg1, %c0_i32 : i32
    %1 = arith.extui %0 : i1 to i32
    %c0_i32_0 = arith.constant 0 : i32
    %2 = arith.cmpi ne, %1, %c0_i32_0 : i32
    scf.if %2 {
      %cst_26 = arith.constant 0.000000e+00 : f32
      %43 = vector.broadcast %cst_26 : f32 to vector<4x256xf32>
      %c0_27 = arith.constant 0 : index
      %c0_28 = arith.constant 0 : index
      %44 = vector.load %arg8[%c0_27, %c0_28] : memref<4x256xf32, #tpu.memory_space<vmem>>, vector<4x256xf32>
      tpu.vector_store %arg8[%c0_27, %c0_28], %43 {strides = array<i32>} : memref<4x256xf32, #tpu.memory_space<vmem>>, vector<4x256xf32>,
      %cst_29 = arith.constant 0.000000e+00 : f32
      %45 = vector.broadcast %cst_29 : f32 to vector<4x256xf32>
      %c0_30 = arith.constant 0 : index
      %c0_31 = arith.constant 0 : index
      %46 = vector.load %arg9[%c0_30, %c0_31] : memref<4x256xf32, #tpu.memory_space<vmem>>, vector<4x256xf32>
      tpu.vector_store %arg9[%c0_30, %c0_31], %45 {strides = array<i32>} : memref<4x256xf32, #tpu.memory_space<vmem>>, vector<4x256xf32>,
      %cst_32 = arith.constant 0.000000e+00 : f32
      %47 = vector.broadcast %cst_32 : f32 to vector<4x256xf32>
      %c0_33 = arith.constant 0 : index
      %c0_34 = arith.constant 0 : index
      %48 = vector.load %arg10[%c0_33, %c0_34] : memref<4x256xf32, #tpu.memory_space<vmem>>, vector<4x256xf32>
      tpu.vector_store %arg10[%c0_33, %c0_34], %47 {strides = array<i32>} : memref<4x256xf32, #tpu.memory_space<vmem>>, vector<4x256xf32>,
      %cst_35 = arith.constant 0.000000e+00 : f32
      %49 = vector.broadcast %cst_35 : f32 to vector<1x256xf32>
      %c0_36 = arith.constant 0 : index
      %c0_37 = arith.constant 0 : index
      %50 = vector.load %arg11[%c0_36, %c0_37] : memref<1x256xf32, #tpu.memory_space<vmem>>, vector<1x256xf32>
      tpu.vector_store %arg11[%c0_36, %c0_37], %49 {strides = array<i32>} : memref<1x256xf32, #tpu.memory_space<vmem>>, vector<1x256xf32>,
    } else {
    }
    %c0 = arith.constant 0 : index
    %c0_1 = arith.constant 0 : index
    %c0_2 = arith.constant 0 : index
    %3 = vector.load %arg2[%c0, %c0_1, %c0_2] : memref<1x4x256xf32, #tpu.memory_space<vmem>>, vector<1x4x256xf32>
    %4 = vector.shape_cast %3 : vector<1x4x256xf32> to vector<4x256xf32>
    %c0_3 = arith.constant 0 : index
    %c0_4 = arith.constant 0 : index
    %c0_5 = arith.constant 0 : index
    %5 = vector.load %arg3[%c0_3, %c0_4, %c0_5] : memref<1x1x256xi32, #tpu.memory_space<vmem>>, vector<1x1x256xi32>
    %6 = vector.shape_cast %5 : vector<1x1x256xi32> to vector<1x256xi32>
    %7 = tpu.iota {dimensions = array<i32: 0>} : vector<4x256xi32>
    %8 = vector.broadcast %6 : vector<1x256xi32> to vector<4x256xi32>
    %9 = arith.cmpi eq, %7, %8 : vector<4x256xi32>
    %10 = arith.extui %9 : vector<4x256xi1> to vector<4x256xi32>
    %11 = arith.sitofp %10 : vector<4x256xi32> to vector<4x256xf32>
    %cst = arith.constant dense<0xFF800000> : vector<256xf32>
    %12 = vector.multi_reduction <maximumf>, %4, %cst [0] : vector<4x256xf32> to vector<256xf32>
    %13 = vector.shape_cast %12 : vector<256xf32> to vector<1x256xf32>
    %14 = vector.broadcast %13 : vector<1x256xf32> to vector<4x256xf32>
    %15 = arith.subf %4, %14 : vector<4x256xf32>
    %16 = math.exp %15 : vector<4x256xf32>
    %cst_6 = arith.constant dense<0.000000e+00> : vector<256xf32>
    %17 = vector.multi_reduction <add>, %16, %cst_6 [0] : vector<4x256xf32> to vector<256xf32>
    %18 = vector.shape_cast %17 : vector<256xf32> to vector<1x256xf32>
    %19 = tpu.reciprocal %18 : vector<1x256xf32> -> vector<1x256xf32>
    %20 = vector.broadcast %19 : vector<1x256xf32> to vector<4x256xf32>
    %21 = arith.mulf %16, %20 : vector<4x256xf32>
    %22 = arith.mulf %21, %11 : vector<4x256xf32>
    %c0_7 = arith.constant 0 : index
    %c0_8 = arith.constant 0 : index
    %23 = vector.load %arg8[%c0_7, %c0_8] : memref<4x256xf32, #tpu.memory_space<vmem>>, vector<4x256xf32>
    %24 = arith.addf %23, %22 : vector<4x256xf32>
    %c0_9 = arith.constant 0 : index
    %c0_10 = arith.constant 0 : index
    %25 = vector.load %arg8[%c0_9, %c0_10] : memref<4x256xf32, #tpu.memory_space<vmem>>, vector<4x256xf32>
    tpu.vector_store %arg8[%c0_9, %c0_10], %24 {strides = array<i32>} : memref<4x256xf32, #tpu.memory_space<vmem>>, vector<4x256xf32>,
    %c0_11 = arith.constant 0 : index
    %c0_12 = arith.constant 0 : index
    %26 = vector.load %arg9[%c0_11, %c0_12] : memref<4x256xf32, #tpu.memory_space<vmem>>, vector<4x256xf32>
    %27 = arith.addf %26, %21 : vector<4x256xf32>
    %c0_13 = arith.constant 0 : index
    %c0_14 = arith.constant 0 : index
    %28 = vector.load %arg9[%c0_13, %c0_14] : memref<4x256xf32, #tpu.memory_space<vmem>>, vector<4x256xf32>
    tpu.vector_store %arg9[%c0_13, %c0_14], %27 {strides = array<i32>} : memref<4x256xf32, #tpu.memory_space<vmem>>, vector<4x256xf32>,
    %c0_15 = arith.constant 0 : index
    %c0_16 = arith.constant 0 : index
    %29 = vector.load %arg10[%c0_15, %c0_16] : memref<4x256xf32, #tpu.memory_space<vmem>>, vector<4x256xf32>
    %30 = arith.addf %29, %11 : vector<4x256xf32>
    %c0_17 = arith.constant 0 : index
    %c0_18 = arith.constant 0 : index
    %31 = vector.load %arg10[%c0_17, %c0_18] : memref<4x256xf32, #tpu.memory_space<vmem>>, vector<4x256xf32>
    tpu.vector_store %arg10[%c0_17, %c0_18], %30 {strides = array<i32>} : memref<4x256xf32, #tpu.memory_space<vmem>>, vector<4x256xf32>,
    %32 = arith.mulf %15, %11 : vector<4x256xf32>
    %cst_19 = arith.constant dense<0.000000e+00> : vector<256xf32>
    %33 = vector.multi_reduction <add>, %32, %cst_19 [0] : vector<4x256xf32> to vector<256xf32>
    %34 = vector.shape_cast %33 : vector<256xf32> to vector<1x256xf32>
    %35 = math.log %18 : vector<1x256xf32>
    %36 = arith.subf %35, %34 : vector<1x256xf32>
    %c0_20 = arith.constant 0 : index
    %c0_21 = arith.constant 0 : index
    %37 = vector.load %arg11[%c0_20, %c0_21] : memref<1x256xf32, #tpu.memory_space<vmem>>, vector<1x256xf32>
    %38 = arith.addf %37, %36 : vector<1x256xf32>
    %c0_22 = arith.constant 0 : index
    %c0_23 = arith.constant 0 : index
    %39 = vector.load %arg11[%c0_22, %c0_23] : memref<1x256xf32, #tpu.memory_space<vmem>>, vector<1x256xf32>
    tpu.vector_store %arg11[%c0_22, %c0_23], %38 {strides = array<i32>} : memref<1x256xf32, #tpu.memory_space<vmem>>, vector<1x256xf32>,
    %c0_i32_24 = arith.constant 0 : i32
    %40 = arith.cmpi eq, %arg1, %c0_i32_24 : i32
    %41 = arith.extui %40 : i1 to i32
    %c0_i32_25 = arith.constant 0 : i32
    %42 = arith.cmpi ne, %41, %c0_i32_25 : i32
    scf.if %42 {
      %c0_26 = arith.constant 0 : index
      %c0_27 = arith.constant 0 : index
      %43 = vector.load %arg8[%c0_26, %c0_27] : memref<4x256xf32, #tpu.memory_space<vmem>>, vector<4x256xf32>
      %cst_28 = arith.constant dense<0.000000e+00> : vector<4xf32>
      %44 = vector.multi_reduction <add>, %43, %cst_28 [1] : vector<4x256xf32> to vector<4xf32>
      %45 = vector.shape_cast %44 : vector<4xf32> to vector<4x1xf32>
      %c0_29 = arith.constant 0 : index
      %c0_30 = arith.constant 0 : index
      %46 = vector.load %arg9[%c0_29, %c0_30] : memref<4x256xf32, #tpu.memory_space<vmem>>, vector<4x256xf32>
      %cst_31 = arith.constant dense<0.000000e+00> : vector<4xf32>
      %47 = vector.multi_reduction <add>, %46, %cst_31 [1] : vector<4x256xf32> to vector<4xf32>
      %48 = vector.shape_cast %47 : vector<4xf32> to vector<4x1xf32>
      %c0_32 = arith.constant 0 : index
      %c0_33 = arith.constant 0 : index
      %49 = vector.load %arg10[%c0_32, %c0_33] : memref<4x256xf32, #tpu.memory_space<vmem>>, vector<4x256xf32>
      %cst_34 = arith.constant dense<0.000000e+00> : vector<4xf32>
      %50 = vector.multi_reduction <add>, %49, %cst_34 [1] : vector<4x256xf32> to vector<4xf32>
      %51 = vector.shape_cast %50 : vector<4xf32> to vector<4x1xf32>
      %c0_35 = arith.constant 0 : index
      %c0_36 = arith.constant 0 : index
      %c0_37 = arith.constant 0 : index
      %52 = vector.load %arg4[%c0_35, %c0_36, %c0_37] : memref<1x4x1xf32, #tpu.memory_space<vmem>>, vector<1x4x1xf32>
      %53 = vector.shape_cast %52 : vector<1x4x1xf32> to vector<4x1xf32>
      %54 = vector.shape_cast %45 : vector<4x1xf32> to vector<1x4x1xf32>
      tpu.vector_store %arg4[%c0_35, %c0_36, %c0_37], %54 {strides = array<i32>} : memref<1x4x1xf32, #tpu.memory_space<vmem>>, vector<1x4x1xf32>,
      %55 = arith.subf %48, %45 : vector<4x1xf32>
      %c0_38 = arith.constant 0 : index
      %c0_39 = arith.constant 0 : index
      %c0_40 = arith.constant 0 : index
      %56 = vector.load %arg5[%c0_38, %c0_39, %c0_40] : memref<1x4x1xf32, #tpu.memory_space<vmem>>, vector<1x4x1xf32>
      %57 = vector.shape_cast %56 : vector<1x4x1xf32> to vector<4x1xf32>
      %58 = vector.shape_cast %55 : vector<4x1xf32> to vector<1x4x1xf32>
      tpu.vector_store %arg5[%c0_38, %c0_39, %c0_40], %58 {strides = array<i32>} : memref<1x4x1xf32, #tpu.memory_space<vmem>>, vector<1x4x1xf32>,
      %59 = arith.subf %51, %45 : vector<4x1xf32>
      %c0_41 = arith.constant 0 : index
      %c0_42 = arith.constant 0 : index
      %c0_43 = arith.constant 0 : index
      %60 = vector.load %arg6[%c0_41, %c0_42, %c0_43] : memref<1x4x1xf32, #tpu.memory_space<vmem>>, vector<1x4x1xf32>
      %61 = vector.shape_cast %60 : vector<1x4x1xf32> to vector<4x1xf32>
      %62 = vector.shape_cast %59 : vector<4x1xf32> to vector<1x4x1xf32>
      tpu.vector_store %arg6[%c0_41, %c0_42, %c0_43], %62 {strides = array<i32>} : memref<1x4x1xf32, #tpu.memory_space<vmem>>, vector<1x4x1xf32>,
      %c0_44 = arith.constant 0 : index
      %c0_45 = arith.constant 0 : index
      %63 = vector.load %arg11[%c0_44, %c0_45] : memref<1x256xf32, #tpu.memory_space<vmem>>, vector<1x256xf32>
      %cst_46 = arith.constant dense<0.000000e+00> : vector<1xf32>
      %64 = vector.multi_reduction <add>, %63, %cst_46 [1] : vector<1x256xf32> to vector<1xf32>
      %65 = vector.shape_cast %64 : vector<1xf32> to vector<1x1xf32>
      %c0_47 = arith.constant 0 : index
      %c0_48 = arith.constant 0 : index
      %c0_49 = arith.constant 0 : index
      %66 = vector.load %arg7[%c0_47, %c0_48, %c0_49] : memref<1x1x1xf32, #tpu.memory_space<vmem>>, vector<1x1x1xf32>
      %67 = vector.shape_cast %66 : vector<1x1x1xf32> to vector<1x1xf32>
      %68 = vector.shape_cast %65 : vector<1x1xf32> to vector<1x1x1xf32>
      tpu.vector_store %arg7[%c0_47, %c0_48, %c0_49], %68 {strides = array<i32>} : memref<1x1x1xf32, #tpu.memory_space<vmem>>, vector<1x1x1xf32>,
    } else {
    }
    return
  }
  func.func @transform_0(%arg0: i32, %arg1: i32) -> (i32, i32, i32) {
    %c0_i32 = arith.constant 0 : i32
    %c0_i32_0 = arith.constant 0 : i32
    return %arg0, %c0_i32, %arg1 : i32, i32, i32
  }
  func.func @transform_1(%arg0: i32, %arg1: i32) -> (i32, i32, i32) {
    %c0_i32 = arith.constant 0 : i32
    %c0_i32_0 = arith.constant 0 : i32
    return %arg0, %c0_i32, %arg1 : i32, i32, i32
  }
  func.func @transform_2(%arg0: i32, %arg1: i32) -> (i32, i32, i32) {
    %c0_i32 = arith.constant 0 : i32
    %c0_i32_0 = arith.constant 0 : i32
    %c0_i32_1 = arith.constant 0 : i32
    return %arg0, %c0_i32, %c0_i32_0 : i32, i32, i32
  }
  func.func @transform_3(%arg0: i32, %arg1: i32) -> (i32, i32, i32) {
    %c0_i32 = arith.constant 0 : i32
    %c0_i32_0 = arith.constant 0 : i32
    %c0_i32_1 = arith.constant 0 : i32
    return %arg0, %c0_i32, %c0_i32_0 : i32, i32, i32
  }
  func.func @transform_4(%arg0: i32, %arg1: i32) -> (i32, i32, i32) {
    %c0_i32 = arith.constant 0 : i32
    %c0_i32_0 = arith.constant 0 : i32
    %c0_i32_1 = arith.constant 0 : i32
    return %arg0, %c0_i32, %c0_i32_0 : i32, i32, i32
  }
  func.func @transform_5(%arg0: i32, %arg1: i32) -> (i32, i32, i32) {
    %c0_i32 = arith.constant 0 : i32
    %c0_i32_0 = arith.constant 0 : i32
    %c0_i32_1 = arith.constant 0 : i32
    return %arg0, %c0_i32, %c0_i32_0 : i32, i32, i32
  }
}

</mosaic_0001>

<llo_original>
// kernel: dc_and_ce_loss.1
$region0: #{dc_and_ce_loss.1}
  #allocation0 [shape = 'u32[]', space=smem, size = 0x4, offset = 0x4, fixed_abs, tag = 'smem constant byte address 0x4 - core index']
  #allocation1 [shape = 'u32[144,128]{1,0:T(1,128)}', space=vmem, size = 0x12000, scoped, tag = 'internal scratch']
  #allocation2 [shape = 'f32[4,256]{1,0:T(4,128)}', space=vmem, size = 0x1000, scoped, tag = 'scratch operand']
  #allocation3 [shape = 'f32[4,256]{1,0:T(4,128)}', space=vmem, size = 0x1000, scoped, tag = 'scratch operand']
  #allocation4 [shape = 'f32[4,256]{1,0:T(4,128)}', space=vmem, size = 0x1000, scoped, tag = 'scratch operand']
  #allocation5 [shape = 'f32[1,256]{1,0:T(1,128)}', space=vmem, size = 0x400, scoped, tag = 'scratch operand']
  %s0 = inlined_call_operand.vmem [shape: f32[2,4,256], index: 0, kind: input, shape index: {}]
  %s1 = inlined_call_operand.vmem [shape: s32[2,1,256], index: 1, kind: input, shape index: {}]
  %s2 = inlined_call_operand.vmem [shape: f32[2,4,1], index: 2, kind: output, shape index: {0}]
  %s3 = inlined_call_operand.vmem [shape: f32[2,4,1], index: 3, kind: output, shape index: {1}]
  %s4 = inlined_call_operand.vmem [shape: f32[2,4,1], index: 4, kind: output, shape index: {2}]
  %s5 = inlined_call_operand.vmem [shape: f32[2,1,1], index: 5, kind: output, shape index: {3}]
  %6 = xla_tuple %s2, %s3, %s4, %s5
  %s7 = sld [smem:[#allocation0]]
  $region73: #{dc_and_ce_loss.1} parent=0
    _
  %s9 = ssub.s32 1, %s7
  %s10 = scalar_select 0, %s9, %s7
  loop: start=0, step=1, limit=4
  $region2: #{dc_and_ce_loss.1} parent=0 // loop_pre_header
    _
  $region3: #{dc_and_ce_loss.1} parent=0 // loop_header
    %s12 = sphi 0, %s16
    %p13 = scmp.ge.s32.totalorder %s12, 4
    %s19 = sphi 0, %s31
    %s20 = sphi 0, %s27
    %s21 = sphi 0, %s19
    %s22 = sphi 0, %s20
    %s23 = sphi 0, %s21
    %s24 = sphi 0, %s22
    %s36 = sphi 0, %s38
    %s39 = sphi 0, %s36
    %s40 = sphi 0, %s39
    %s56 = sphi 0, %s40
    %s64 = sphi 0, %s66
    %s67 = sphi 0, %s64
    %s68 = sphi 0, %s67
    %s84 = sphi 0, %s68
    %s90 = sphi 0, %s92
    %s93 = sphi 0, %s90
    %s94 = sphi 0, %s93
    %s110 = sphi 0, %s94
    %s116 = sphi 0, %s118
    %s119 = sphi 0, %s116
    %s120 = sphi 0, %s119
    %s136 = sphi 0, %s120
    %s142 = sphi 0, %s144
    %s145 = sphi 0, %s142
    %s146 = sphi 0, %s145
    %s162 = sphi 0, %s146
    %s168 = sphi 0, %s170
    %s171 = sphi 0, %s168
    %s172 = sphi 0, %s171
    %s188 = sphi 0, %s172
  $region4: #{dc_and_ce_loss.1} parent=0 // loop_header_branch
    %15 = sbr.rel (%p13) target = $region8
  $region5: #{dc_and_ce_loss.1} parent=0 // loop_body
    %s17 = ssub.s32 %s12, 1
    %s18 = ssub.s32 %s12, 2
    %s25 = sadd.s32 1, %s20
    %p26 = scmp.ge.s32.totalorder %s25, 1
    %s27 = scalar_select %p26, 0, %s25
    %s28 = sadd.s32 1, %s19
    %s29 = scalar_select %p26, %s28, %s19
    %p30 = scmp.ge.s32.totalorder %s29, 2
    %s31 = scalar_select %p30, 0, %s29
    %s32 = ssub.s32 %s19, %s31
    %s33 = ssub.s32 %s20, %s27
    %s34 = sor.u32 %s32, %s33
    %p35 = scmp.eq.s32.totalorder %s34, 0
    %s37 = sadd.s32 %s36, 1
    %s38 = scalar_select %p35, %s36, %s37
    %p41 = pneg %p35
    %p42 = scmp.eq.s32.totalorder %s12, 1
    %p43 = por %p41, %p42
    %p44 = scmp.ne.s32.totalorder %s36, %s39
    %p45 = scmp.eq.s32.totalorder %s12, 0
    %p46 = por %p44, %p45
    %p47 = scmp.ne.s32.totalorder %s36, %s39
    %p48 = scmp.eq.s32.totalorder %s17, 1
    %p49 = por %p47, %p48
    %p50 = scmp.ne.s32.totalorder %s39, %s40
    %p51 = scmp.eq.s32.totalorder %s17, 0
    %p52 = por %p50, %p51
    %p53 = scmp.ne.s32.totalorder %s39, %s40
    %p54 = scmp.eq.s32.totalorder %s18, 1
    %p55 = por %p53, %p54
    %p57 = scmp.ne.s32.totalorder %s40, %s56
    %p58 = scmp.eq.s32.totalorder %s18, 0
    %p59 = por %p57, %p58
    %s60 = ssub.s32 %s19, %s31
    %s61 = ssub.s32 %s20, %s27
    %s62 = sor.u32 %s60, %s61
    %p63 = scmp.eq.s32.totalorder %s62, 0
    %s65 = sadd.s32 %s64, 1
    %s66 = scalar_select %p63, %s64, %s65
    %p69 = pneg %p63
    %p70 = scmp.eq.s32.totalorder %s12, 1
    %p71 = por %p69, %p70
    %p72 = scmp.ne.s32.totalorder %s64, %s67
    %p73 = scmp.eq.s32.totalorder %s12, 0
    %p74 = por %p72, %p73
    %p75 = scmp.ne.s32.totalorder %s64, %s67
    %p76 = scmp.eq.s32.totalorder %s17, 1
    %p77 = por %p75, %p76
    %p78 = scmp.ne.s32.totalorder %s67, %s68
    %p79 = scmp.eq.s32.totalorder %s17, 0
    %p80 = por %p78, %p79
    %p81 = scmp.ne.s32.totalorder %s67, %s68
    %p82 = scmp.eq.s32.totalorder %s18, 1
    %p83 = por %p81, %p82
    %p85 = scmp.ne.s32.totalorder %s68, %s84
    %p86 = scmp.eq.s32.totalorder %s18, 0
    %p87 = por %p85, %p86
    %s88 = ssub.s32 %s19, %s31
    %p89 = scmp.eq.s32.totalorder %s88, 0
    %s91 = sadd.s32 %s90, 1
    %s92 = scalar_select %p89, %s90, %s91
    %p95 = pneg %p89
    %p96 = scmp.eq.s32.totalorder %s12, 1
    %p97 = por %p95, %p96
    %p98 = scmp.ne.s32.totalorder %s90, %s93
    %p99 = scmp.eq.s32.totalorder %s12, 0
    %p100 = por %p98, %p99
    %p101 = scmp.ne.s32.totalorder %s90, %s93
    %p102 = scmp.eq.s32.totalorder %s17, 1
    %p103 = por %p101, %p102
    %p104 = scmp.ne.s32.totalorder %s93, %s94
    %p105 = scmp.eq.s32.totalorder %s17, 0
    %p106 = por %p104, %p105
    %p107 = scmp.ne.s32.totalorder %s93, %s94
    %p108 = scmp.eq.s32.totalorder %s18, 1
    %p109 = por %p107, %p108
    %p111 = scmp.ne.s32.totalorder %s94, %s110
    %p112 = scmp.eq.s32.totalorder %s18, 0
    %p113 = por %p111, %p112
    %s114 = ssub.s32 %s19, %s31
    %p115 = scmp.eq.s32.totalorder %s114, 0
    %s117 = sadd.s32 %s116, 1
    %s118 = scalar_select %p115, %s116, %s117
    %p121 = pneg %p115
    %p122 = scmp.eq.s32.totalorder %s12, 1
    %p123 = por %p121, %p122
    %p124 = scmp.ne.s32.totalorder %s116, %s119
    %p125 = scmp.eq.s32.totalorder %s12, 0
    %p126 = por %p124, %p125
    %p127 = scmp.ne.s32.totalorder %s116, %s119
    %p128 = scmp.eq.s32.totalorder %s17, 1
    %p129 = por %p127, %p128
    %p130 = scmp.ne.s32.totalorder %s119, %s120
    %p131 = scmp.eq.s32.totalorder %s17, 0
    %p132 = por %p130, %p131
    %p133 = scmp.ne.s32.totalorder %s119, %s120
    %p134 = scmp.eq.s32.totalorder %s18, 1
    %p135 = por %p133, %p134
    %p137 = scmp.ne.s32.totalorder %s120, %s136
    %p138 = scmp.eq.s32.totalorder %s18, 0
    %p139 = por %p137, %p138
    %s140 = ssub.s32 %s19, %s31
    %p141 = scmp.eq.s32.totalorder %s140, 0
    %s143 = sadd.s32 %s142, 1
    %s144 = scalar_select %p141, %s142, %s143
    %p147 = pneg %p141
    %p148 = scmp.eq.s32.totalorder %s12, 1
    %p149 = por %p147, %p148
    %p150 = scmp.ne.s32.totalorder %s142, %s145
    %p151 = scmp.eq.s32.totalorder %s12, 0
    %p152 = por %p150, %p151
    %p153 = scmp.ne.s32.totalorder %s142, %s145
    %p154 = scmp.eq.s32.totalorder %s17, 1
    %p155 = por %p153, %p154
    %p156 = scmp.ne.s32.totalorder %s145, %s146
    %p157 = scmp.eq.s32.totalorder %s17, 0
    %p158 = por %p156, %p157
    %p159 = scmp.ne.s32.totalorder %s145, %s146
    %p160 = scmp.eq.s32.totalorder %s18, 1
    %p161 = por %p159, %p160
    %p163 = scmp.ne.s32.totalorder %s146, %s162
    %p164 = scmp.eq.s32.totalorder %s18, 0
    %p165 = por %p163, %p164
    %s166 = ssub.s32 %s19, %s31
    %p167 = scmp.eq.s32.totalorder %s166, 0
    %s169 = sadd.s32 %s168, 1
    %s170 = scalar_select %p167, %s168, %s169
    %p173 = pneg %p167
    %p174 = scmp.eq.s32.totalorder %s12, 1
    %p175 = por %p173, %p174
    %p176 = scmp.ne.s32.totalorder %s168, %s171
    %p177 = scmp.eq.s32.totalorder %s12, 0
    %p178 = por %p176, %p177
    %p179 = scmp.ne.s32.totalorder %s168, %s171
    %p180 = scmp.eq.s32.totalorder %s17, 1
    %p181 = por %p179, %p180
    %p182 = scmp.ne.s32.totalorder %s171, %s172
    %p183 = scmp.eq.s32.totalorder %s17, 0
    %p184 = por %p182, %p183
    %p185 = scmp.ne.s32.totalorder %s171, %s172
    %p186 = scmp.eq.s32.totalorder %s18, 1
    %p187 = por %p185, %p186
    %p189 = scmp.ne.s32.totalorder %s172, %s188
    %p190 = scmp.eq.s32.totalorder %s18, 0
    %p191 = por %p189, %p190
    %p192 = scmp.le.s32.totalorder 1, %s12
    %p193 = scmp.lt.s32.totalorder %s12, 3
    %p194 = pnand %p192, %p193
    %p195 = pneg %p194
    // Predicated region
    $region9: #{dc_and_ce_loss.1} parent=5 // pred_check
      _
    $region10: #{dc_and_ce_loss.1} parent=5 // pred_check_branch
      %197 = sbr.rel (%p194) target = $region12
    $region11: #{dc_and_ce_loss.1} parent=5 // pred_region
      %s198 = ssub.s32 %s12, 1
    $region12: #{dc_and_ce_loss.1} parent=5 // pred_fallthru
      _
    %p199 = scmp.lt.s32.totalorder %s12, 2
    // Predicated region
    $region13: #{dc_and_ce_loss.1} parent=5 // pred_check
      %p200 = pneg %p199
    $region14: #{dc_and_ce_loss.1} parent=5 // pred_check_branch
      %202 = sbr.rel (%p200) target = $region16
    $region15: #{dc_and_ce_loss.1} parent=5 // pred_region
      // Predicated region
      $region17: #{dc_and_ce_loss.1} parent=15 // pred_check
        %p203 = pneg %p46
      $region18: #{dc_and_ce_loss.1} parent=15 // pred_check_branch
        %205 = sbr.rel (%p203) target = $region20
      $region19: #{dc_and_ce_loss.1} parent=15 // pred_region
        %s206 = smul.u32 2, %s20
        %p207 = scmp.lt.s32.totalorder %s19, 1
        %s208 = scalar_select %p207, %s19, 1
        %p209 = scmp.lt.s32.totalorder %s206, 1
        %s210 = scalar_select %p209, %s206, 1
        %s211 = smul.addr %s208, 2
        %s212 = sadd.s32 %s210, %s211
        %s213 = smul.addr %s212, 4
        %s214 = scalar_lea.vmem %s0, %s213
        %s215 = smul.u32 2, %s20
      $region20: #{dc_and_ce_loss.1} parent=15 // pred_fallthru
        _
      // Predicated region
      $region21: #{dc_and_ce_loss.1} parent=15 // pred_check
        %p216 = pneg %p74
      $region22: #{dc_and_ce_loss.1} parent=15 // pred_check_branch
        %218 = sbr.rel (%p216) target = $region24
      $region23: #{dc_and_ce_loss.1} parent=15 // pred_region
        %s219 = smul.u32 2, %s20
        %p220 = scmp.lt.s32.totalorder %s19, 1
        %s221 = scalar_select %p220, %s19, 1
        %p222 = scmp.lt.s32.totalorder %s219, 1
        %s223 = scalar_select %p222, %s219, 1
        %s224 = smul.addr %s221, 2
        %s225 = sadd.s32 %s223, %s224
        %s226 = scalar_lea.vmem %s1, %s225
        %s227 = smul.u32 2, %s20
      $region24: #{dc_and_ce_loss.1} parent=15 // pred_fallthru
        _
    $region16: #{dc_and_ce_loss.1} parent=5 // pred_fallthru
      _
    %p228 = scmp.le.s32.totalorder 1, %s12
    %p229 = scmp.lt.s32.totalorder %s12, 3
    %p230 = pnand %p228, %p229
    %p231 = pneg %p230
    // Predicated region
    $region25: #{dc_and_ce_loss.1} parent=5 // pred_check
      _
    $region26: #{dc_and_ce_loss.1} parent=5 // pred_check_branch
      %233 = sbr.rel (%p230) target = $region28
    $region27: #{dc_and_ce_loss.1} parent=5 // pred_region
      %s234 = ssub.s32 %s12, 1
      %s235 = smul.u32 2, %s22
      %p236 = scmp.lt.s32.totalorder %s21, 1
      %s237 = scalar_select %p236, %s21, 1
      %p238 = scmp.lt.s32.totalorder %s235, 1
      %s239 = scalar_select %p238, %s235, 1
      %s240 = smul.addr %s237, 2
      %s241 = sadd.s32 %s239, %s240
      %s242 = smul.addr %s241, 4
      %s243 = scalar_lea.vmem %s0, %s242
      %p244 = pneg %p52
      %p245 = pneg %p49
      %s246 = smul.u32 2, %s22
      %p247 = scmp.lt.s32.totalorder %s21, 1
      %s248 = scalar_select %p247, %s21, 1
      %p249 = scmp.lt.s32.totalorder %s246, 1
      %s250 = scalar_select %p249, %s246, 1
      %s251 = smul.addr %s248, 2
      %s252 = sadd.s32 %s250, %s251
      %s253 = scalar_lea.vmem %s1, %s252
      %p254 = pneg %p80
      %p255 = pneg %p77
      %p256 = pneg %p106
      %p257 = pneg %p103
      %p258 = scmp.lt.s32.totalorder %s21, 1
      %s259 = scalar_select %p258, %s21, 1
      %s260 = smul.addr %s259, 4
      %s261 = scalar_lea.vmem %s2, %s260
      %p262 = pneg %p132
      %p263 = pneg %p129
      %p264 = scmp.lt.s32.totalorder %s21, 1
      %s265 = scalar_select %p264, %s21, 1
      %s266 = smul.addr %s265, 4
      %s267 = scalar_lea.vmem %s3, %s266
      %p268 = pneg %p158
      %p269 = pneg %p155
      %p270 = scmp.lt.s32.totalorder %s21, 1
      %s271 = scalar_select %p270, %s21, 1
      %s272 = smul.addr %s271, 4
      %s273 = scalar_lea.vmem %s4, %s272
      %p274 = pneg %p184
      %p275 = pneg %p181
      %p276 = scmp.lt.s32.totalorder %s21, 1
      %s277 = scalar_select %p276, %s21, 1
      %s278 = scalar_lea.vmem %s5, %s277
      %s279 = smul.u32 2, %s22
      %p280 = scmp.lt.s32.totalorder %s21, 1
      %s281 = scalar_select %p280, %s21, 1
      %p282 = scmp.lt.s32.totalorder %s279, 1
      %s283 = scalar_select %p282, %s279, 1
      %s284 = smul.addr %s281, 2
      %s285 = sadd.s32 %s283, %s284
      %s286 = smul.addr %s285, 4
      %s287 = scalar_lea.vmem %s0, %s286
      %s288 = smul.u32 2, %s22
      %s289 = smul.u32 2, %s22
      %p290 = scmp.lt.s32.totalorder %s21, 1
      %s291 = scalar_select %p290, %s21, 1
      %p292 = scmp.lt.s32.totalorder %s289, 1
      %s293 = scalar_select %p292, %s289, 1
      %s294 = smul.addr %s291, 2
      %s295 = sadd.s32 %s293, %s294
      %s296 = scalar_lea.vmem %s1, %s295
      %s297 = smul.u32 2, %s22
      %p298 = scmp.lt.s32.totalorder %s21, 1
      %s299 = scalar_select %p298, %s21, 1
      %s300 = smul.addr %s299, 4
      %s301 = scalar_lea.vmem %s2, %s300
      %p302 = scmp.lt.s32.totalorder %s21, 1
      %s303 = scalar_select %p302, %s21, 1
      %s304 = smul.addr %s303, 4
      %s305 = scalar_lea.vmem %s3, %s304
      %p306 = scmp.lt.s32.totalorder %s21, 1
      %s307 = scalar_select %p306, %s21, 1
      %s308 = smul.addr %s307, 4
      %s309 = scalar_lea.vmem %s4, %s308
      %p310 = scmp.lt.s32.totalorder %s21, 1
      %s311 = scalar_select %p310, %s21, 1
      %s312 = scalar_lea.vmem %s5, %s311
      %p313 = scmp.eq.s32.totalorder %s22, 0
      // Predicated region
      $region29: #{dc_and_ce_loss.1} parent=27 // pred_check
        %p314 = pneg %p313
      $region30: #{dc_and_ce_loss.1} parent=27 // pred_check_branch
        %316 = sbr.rel (%p314) target = $region32
      $region31: #{dc_and_ce_loss.1} parent=27 // pred_region
        %317 = vst [vmem:[#allocation2] sm:$0xff] 0.0
        %318 = vst [vmem:[#allocation3] sm:$0xff] 0.0
        %319 = vst [vmem:[#allocation4] sm:$0xff] 0.0
        %v320 = vlaneseq
        %vm321 = vcmp.ge.s32.totalorder %v320, 0
        %vm322 = vcmp.lt.s32.totalorder %v320, 256
        %vm323 = vmand %vm321, %vm322
        %324 = vst.msk [vmem:[#allocation5] sm:$0x3] %vm323, 0.0
      $region32: #{dc_and_ce_loss.1} parent=27 // pred_fallthru
        _
      %v325 = vld [vmem:[%s287] sm:$0xff]
      %v326 = vld [vmem:[%s296] sm:$0x3]
      %v327 = vlaneseq
      %v328 = vshrl.u32 %v327, 7
      %v329 = vlaneseq
      %v330 = vshrl.u32 %v329, 7
      %v331 = vsub.s32 0, %v330
      %v332 = vrot.slane %v326, %v331
      %v333 = vlaneseq
      %v334 = vshrl.u32 %v333, 7
      %v335 = vsub.s32 1, %v334
      %v336 = vrot.slane %v326, %v335
      %vm337 = vcmp.eq.s32.totalorder %v328, %v332
      %vm338 = vcmp.eq.s32.totalorder %v328, %v336
      %v339 = vsel %vm337, 1, 0
      %v340 = vsel %vm338, 1, 0
      %v341 = vcvt.s32.f32 %v339
      %v342 = vcvt.s32.f32 %v340
      %v344 = vcombine.high %v325, %v325
      %vm346 = vcmask 1043456
      %v347 = vsel %vm346, %v325, -inf
      %v348 = vrot.slane %v347, 4
      %v349 = vmax.f32 %v347, %v348
      %v350 = vrot.slane %v349, 2
      %v351 = vmax.f32 %v349, %v350
      %v352 = vrot.slane %v351, 1
      %v353 = vmax.f32 %v351, %v352
      %v354 = vsel %vm346, %v344, -inf
      %v355 = vrot.slane %v354, 4
      %v356 = vmax.f32 %v354, %v355
      %v357 = vrot.slane %v356, 2
      %v358 = vmax.f32 %v356, %v357
      %v359 = vrot.slane %v358, 1
      %v360 = vmax.f32 %v358, %v359
      %v363 = vcombine.low %v353, %v360
      %v365 = vsub.f32 %v325, %v363
      %v366 = vmul.f32 %v365, 1.442695
      %v367 = vpow.pop %v366
      %v369 = vcombine.high %v367, %v367
      %v371 = vsel %vm346, %v367, 0.0
      %v372 = vrot.slane %v371, 4
      %v373 = vadd.f32 %v371, %v372
      %v374 = vrot.slane %v373, 2
      %v375 = vadd.f32 %v373, %v374
      %v376 = vrot.slane %v375, 1
      %v377 = vadd.f32 %v375, %v376
      %v378 = vsel %vm346, %v369, 0.0
      %v379 = vrot.slane %v378, 4
      %v380 = vadd.f32 %v378, %v379
      %v381 = vrot.slane %v380, 2
      %v382 = vadd.f32 %v380, %v381
      %v383 = vrot.slane %v382, 1
      %v384 = vadd.f32 %v382, %v383
      %v385 = vrcp.pop %v377
      %v386 = vrcp.pop %v384
      %v389 = vcombine.low %v385, %v386
      %v391 = vmul.f32 %v367, %v389
      %v394 = vcombine.low %v341, %v342
      %v396 = vmul.f32 %v391, %v394
      %v397 = vld [vmem:[#allocation2] sm:$0xff]
      %v398 = vadd.f32 %v397, %v396
      %399 = vst [vmem:[#allocation2] sm:$0xff] %v398
      %v400 = vld [vmem:[#allocation3] sm:$0xff]
      %v401 = vadd.f32 %v400, %v391
      %402 = vst [vmem:[#allocation3] sm:$0xff] %v401
      %v403 = vld [vmem:[#allocation4] sm:$0xff]
      %v404 = vadd.f32 %v403, %v394
      %405 = vst [vmem:[#allocation4] sm:$0xff] %v404
      %v406 = vmul.f32 %v365, %v394
      %v408 = vcombine.high %v406, %v406
      %v410 = vsel %vm346, %v406, 0.0
      %v411 = vrot.slane %v410, 4
      %v412 = vadd.f32 %v410, %v411
      %v413 = vrot.slane %v412, 2
      %v414 = vadd.f32 %v412, %v413
      %v415 = vrot.slane %v414, 1
      %v416 = vadd.f32 %v414, %v415
      %v417 = vsel %vm346, %v408, 0.0
      %v418 = vrot.slane %v417, 4
      %v419 = vadd.f32 %v417, %v418
      %v420 = vrot.slane %v419, 2
      %v421 = vadd.f32 %v419, %v420
      %v422 = vrot.slane %v421, 1
      %v423 = vadd.f32 %v421, %v422
      %v424 = vlog2.pop %v377
      %v425 = vmul.f32 %v424, 0.6931472
      %v426 = vlog2.pop %v384
      %v427 = vmul.f32 %v426, 0.6931472
      %v428 = vsub.f32 %v425, %v416
      %v429 = vsub.f32 %v427, %v423
      %v430 = vld [vmem:[#allocation5] sm:$0x3]
      %v433 = vcombine.low %v428, %v429
      %v435 = vunpack.c.l.s4 1966171168
      %v436 = vunpack.c.0.s8 %v435
      %v437 = vlaneseq
      %v438 = vshrl.u32 %v437, 7
      %v439 = vsub.s32 %v436, %v438
      %v440 = vrot.slane %v433, %v439
      %v442 = vunpack.c.l.s4 1966171168
      %v443 = vunpack.c.0.s8 %v442
      %v444 = vlaneseq
      %v445 = vshrl.u32 %v444, 7
      %v446 = vsub.s32 %v443, %v445
      %v447 = vrot.slane %v440, %v446
      %v449 = vadd.f32 %v430, %v447
      %v450 = vlaneseq
      %vm451 = vcmp.ge.s32.totalorder %v450, 0
      %vm452 = vcmp.lt.s32.totalorder %v450, 256
      %vm453 = vmand %vm451, %vm452
      %454 = vst.msk [vmem:[#allocation5] sm:$0x3] %vm453, %v449
      // Predicated region
      $region33: #{dc_and_ce_loss.1} parent=27 // pred_check
        %p455 = pneg %p313
      $region34: #{dc_and_ce_loss.1} parent=27 // pred_check_branch
        %457 = sbr.rel (%p455) target = $region36
      $region35: #{dc_and_ce_loss.1} parent=27 // pred_region
        %v458 = vld [vmem:[#allocation2] sm:$0xff]
        %v460 = vcombine.high %v458, %v458
        %v462 = vsel %vm346, %v458, 0.0
        %v463 = vsel %vm346, %v460, 0.0
        %v464 = vadd.f32 %v462, %v463
        %465 = vadd.xlane.f32.xlu0 %v464
        %v466 = vpop.xlane.xlu0 %465
        %v467 = vld [vmem:[#allocation3] sm:$0xff]
        %v469 = vcombine.high %v467, %v467
        %v471 = vsel %vm346, %v467, 0.0
        %v472 = vsel %vm346, %v469, 0.0
        %v473 = vadd.f32 %v471, %v472
        %474 = vadd.xlane.f32.xlu0 %v473
        %v475 = vpop.xlane.xlu0 %474
        %v476 = vld [vmem:[#allocation4] sm:$0xff]
        %v478 = vcombine.high %v476, %v476
        %v480 = vsel %vm346, %v476, 0.0
        %v481 = vsel %vm346, %v478, 0.0
        %v482 = vadd.f32 %v480, %v481
        %483 = vadd.xlane.f32.xlu0 %v482
        %v484 = vpop.xlane.xlu0 %483
        %vm485 = vcmask 3072
        %486 = vst.msk [vmem:[%s301] sm:$0xf] %vm485, %v466
        %v487 = vsub.f32 %v475, %v466
        %488 = vst.msk [vmem:[%s305] sm:$0xf] %vm485, %v487
        %v489 = vsub.f32 %v484, %v466
        %490 = vst.msk [vmem:[%s309] sm:$0xf] %vm485, %v489
        %v491 = vld [vmem:[#allocation5] sm:$0x3]
        %v493 = vlaneseq
        %v494 = vshrl.u32 %v493, 7
        %v495 = vsub.s32 0, %v494
        %v496 = vrot.slane %v491, %v495
        %v497 = vlaneseq
        %v498 = vshrl.u32 %v497, 7
        %v499 = vsub.s32 1, %v498
        %v500 = vrot.slane %v491, %v499
        %vm503 = vcmask 1040384
        %v504 = vsel %vm503, %v496, 0.0
        %v505 = vsel %vm503, %v500, 0.0
        %v506 = vadd.f32 %v504, %v505
        %507 = vadd.xlane.f32.xlu0 %v506
        %v508 = vpop.xlane.xlu0 %507
        %vm509 = vcmask 0
        %510 = vst.msk [vmem:[%s312] sm:$0x1] %vm509, %v508
      $region36: #{dc_and_ce_loss.1} parent=27 // pred_fallthru
        _
      %p511 = scmp.lt.s32.totalorder %s21, 1
      %s512 = scalar_select %p511, %s21, 1
      %s513 = smul.addr %s512, 4
      %s514 = scalar_lea.vmem %s2, %s513
      %p515 = scmp.lt.s32.totalorder %s21, 1
      %s516 = scalar_select %p515, %s21, 1
      %s517 = smul.addr %s516, 4
      %s518 = scalar_lea.vmem %s3, %s517
      %p519 = scmp.lt.s32.totalorder %s21, 1
      %s520 = scalar_select %p519, %s21, 1
      %s521 = smul.addr %s520, 4
      %s522 = scalar_lea.vmem %s4, %s521
      %p523 = scmp.lt.s32.totalorder %s21, 1
      %s524 = scalar_select %p523, %s21, 1
      %s525 = scalar_lea.vmem %s5, %s524
      // Predicated region
      $region37: #{dc_and_ce_loss.1} parent=27 // pred_check
        %p526 = pneg %p103
      $region38: #{dc_and_ce_loss.1} parent=27 // pred_check_branch
        %528 = sbr.rel (%p526) target = $region40
      $region39: #{dc_and_ce_loss.1} parent=27 // pred_region
        _
      $region40: #{dc_and_ce_loss.1} parent=27 // pred_fallthru
        _
      // Predicated region
      $region41: #{dc_and_ce_loss.1} parent=27 // pred_check
        %p529 = pneg %p129
      $region42: #{dc_and_ce_loss.1} parent=27 // pred_check_branch
        %531 = sbr.rel (%p529) target = $region44
      $region43: #{dc_and_ce_loss.1} parent=27 // pred_region
        _
      $region44: #{dc_and_ce_loss.1} parent=27 // pred_fallthru
        _
      // Predicated region
      $region45: #{dc_and_ce_loss.1} parent=27 // pred_check
        %p532 = pneg %p155
      $region46: #{dc_and_ce_loss.1} parent=27 // pred_check_branch
        %534 = sbr.rel (%p532) target = $region48
      $region47: #{dc_and_ce_loss.1} parent=27 // pred_region
        _
      $region48: #{dc_and_ce_loss.1} parent=27 // pred_fallthru
        _
      // Predicated region
      $region49: #{dc_and_ce_loss.1} parent=27 // pred_check
        %p535 = pneg %p181
      $region50: #{dc_and_ce_loss.1} parent=27 // pred_check_branch
        %537 = sbr.rel (%p535) target = $region52
      $region51: #{dc_and_ce_loss.1} parent=27 // pred_region
        _
      $region52: #{dc_and_ce_loss.1} parent=27 // pred_fallthru
        _
    $region28: #{dc_and_ce_loss.1} parent=5 // pred_fallthru
      _
    %p538 = scmp.le.s32.totalorder 2, %s12
    // Predicated region
    $region53: #{dc_and_ce_loss.1} parent=5 // pred_check
      %p539 = pneg %p538
    $region54: #{dc_and_ce_loss.1} parent=5 // pred_check_branch
      %541 = sbr.rel (%p539) target = $region56
    $region55: #{dc_and_ce_loss.1} parent=5 // pred_region
      %s542 = ssub.s32 %s12, 2
      // Predicated region
      $region57: #{dc_and_ce_loss.1} parent=55 // pred_check
        %p543 = pneg %p109
      $region58: #{dc_and_ce_loss.1} parent=55 // pred_check_branch
        %545 = sbr.rel (%p543) target = $region60
      $region59: #{dc_and_ce_loss.1} parent=55 // pred_region
        %p546 = scmp.lt.s32.totalorder %s23, 1
        %s547 = scalar_select %p546, %s23, 1
        %s548 = smul.addr %s547, 4
        %s549 = scalar_lea.vmem %s2, %s548
      $region60: #{dc_and_ce_loss.1} parent=55 // pred_fallthru
        _
      // Predicated region
      $region61: #{dc_and_ce_loss.1} parent=55 // pred_check
        %p550 = pneg %p135
      $region62: #{dc_and_ce_loss.1} parent=55 // pred_check_branch
        %552 = sbr.rel (%p550) target = $region64
      $region63: #{dc_and_ce_loss.1} parent=55 // pred_region
        %p553 = scmp.lt.s32.totalorder %s23, 1
        %s554 = scalar_select %p553, %s23, 1
        %s555 = smul.addr %s554, 4
        %s556 = scalar_lea.vmem %s3, %s555
      $region64: #{dc_and_ce_loss.1} parent=55 // pred_fallthru
        _
      // Predicated region
      $region65: #{dc_and_ce_loss.1} parent=55 // pred_check
        %p557 = pneg %p161
      $region66: #{dc_and_ce_loss.1} parent=55 // pred_check_branch
        %559 = sbr.rel (%p557) target = $region68
      $region67: #{dc_and_ce_loss.1} parent=55 // pred_region
        %p560 = scmp.lt.s32.totalorder %s23, 1
        %s561 = scalar_select %p560, %s23, 1
        %s562 = smul.addr %s561, 4
        %s563 = scalar_lea.vmem %s4, %s562
      $region68: #{dc_and_ce_loss.1} parent=55 // pred_fallthru
        _
      // Predicated region
      $region69: #{dc_and_ce_loss.1} parent=55 // pred_check
        %p564 = pneg %p187
      $region70: #{dc_and_ce_loss.1} parent=55 // pred_check_branch
        %566 = sbr.rel (%p564) target = $region72
      $region71: #{dc_and_ce_loss.1} parent=55 // pred_region
        %p567 = scmp.lt.s32.totalorder %s23, 1
        %s568 = scalar_select %p567, %s23, 1
        %s569 = scalar_lea.vmem %s5, %s568
      $region72: #{dc_and_ce_loss.1} parent=55 // pred_fallthru
        _
    $region56: #{dc_and_ce_loss.1} parent=5 // pred_fallthru
      _
  $region6: #{dc_and_ce_loss.1} parent=0 // loop_footer
    %s16 = sadd.s32 1, %s12
  $region7: #{dc_and_ce_loss.1} parent=0 // loop_footer_branch
    %11 = sbr.rel target = $region3
  $region8: #{dc_and_ce_loss.1} parent=0 // loop_exit
    _

</llo_original>
